<compile_context>
chip_gen: v7x
topology: tpu7x:2x2x1
jax: 0.10.0
libtpu: 0.0.40
codegen_flags: <defaults>
</compile_context>

<pallas_src>
import jax
import jax.numpy as jnp
from jax.experimental import pallas as pl
from jax.experimental.pallas import tpu as pltpu

INPUT_SIZE = 26
H1 = 64
H2 = 16
OUT = 1


def _round_up(n, m):
    return ((n + m - 1) // m) * m


def _stable_sigmoid(z):
    # sigmoid without the inf intermediate of exp(-z) for very negative z.
    ez = jnp.exp(-jnp.abs(z))
    return jnp.where(z >= 0, 1.0 / (1.0 + ez), ez / (1.0 + ez))


def mlp_kernel(x_ref, w1_ref, b1_ref, w2_ref, b2_ref, w3_ref, b3_ref, o_ref):
    # x tile: (TB, 26); weights in PyTorch (out, in) layout; biases (out, 1).
    # Compute transposed so batch is the lane axis:
    #   h1^T = W1 @ x^T : (64, TB); h2^T = W2 @ h1^T : (16, TB); z^T : (1, TB)
    x = x_ref[...]

    # Linear(26, 64): contract the feature dims directly (no materialized x^T
    # in the kernel body; Mosaic handles the rhs layout for the MXU).
    h1 = jax.lax.dot_general(
        w1_ref[...], x, (((1,), (1,)), ((), ())),
        preferred_element_type=jnp.float32) + b1_ref[...]
    # TODO(synk): Dropout(p=0.3) is implemented as eval-mode identity; training-
    # mode random masking is not implemented.
    h1 = jnp.maximum(h1, 0.0)

    # Linear(64, 16) + ReLU
    h2 = jnp.dot(w2_ref[...], h1, preferred_element_type=jnp.float32) + b2_ref[...]
    h2 = jnp.maximum(h2, 0.0)

    # Linear(16, 1) + Sigmoid -> (1, TB): lane-dense output tile.
    z = jnp.dot(w3_ref[...], h2, preferred_element_type=jnp.float32) + b3_ref[...]
    o_ref[...] = _stable_sigmoid(z).astype(o_ref.dtype)


def mlp_forward(x, params, *, block_batch=8192):
    """x: (B, 26) float32 -> (B, 1) float32. block_batch = rows per grid step."""
    w1, b1, w2, b2, w3, b3 = params
    B = x.shape[0]

    # Batch tile: multiple of 128 so the (1, TB) output block is lane-dense and
    # the (TB, 26) input block satisfies the (8, 128) sublane constraint.
    tb = min(block_batch, _round_up(B, 128))
    tb = _round_up(tb, 128)
    b_pad = _round_up(B, tb)
    if b_pad != B:
        x = jnp.pad(x, ((0, b_pad - B), (0, 0)))

    grid = (b_pad // tb,)
    const = lambda i: (0, 0)  # weights/biases: same block every step -> VMEM-resident

    out_t = pl.pallas_call(
        mlp_kernel,
        out_shape=jax.ShapeDtypeStruct((OUT, b_pad), jnp.float32),
        grid=grid,
        in_specs=[
            pl.BlockSpec((tb, INPUT_SIZE), lambda i: (i, 0)),  # x batch tile
            pl.BlockSpec((H1, INPUT_SIZE), const),             # w1 (64, 26)
            pl.BlockSpec((H1, 1), const),                      # b1 (64, 1)
            pl.BlockSpec((H2, H1), const),                     # w2 (16, 64)
            pl.BlockSpec((H2, 1), const),                      # b2 (16, 1)
            pl.BlockSpec((OUT, H2), const),                    # w3 (1, 16)
            pl.BlockSpec((OUT, 1), const),                     # b3 (1, 1)
        ],
        out_specs=pl.BlockSpec((OUT, tb), lambda i: (0, i)),
        compiler_params=pltpu.CompilerParams(
            dimension_semantics=("parallel",),
            vmem_limit_bytes=64 << 20),
    )(x, w1, b1, w2, b2, w3, b3)

    # (1, B_pad) -> (B, 1)
    return out_t.reshape(b_pad, OUT)[:B]


def init_params(key):
    """PyTorch nn.Linear default init (U[-1/sqrt(fan_in), +]), (out, in) layout."""
    ks = jax.random.split(key, 6)

    def linear(kw, kb, fan_in, fan_out):
        bound = 1.0 / (fan_in ** 0.5)
        w = jax.random.uniform(kw, (fan_out, fan_in), jnp.float32, -bound, bound)
        b = jax.random.uniform(kb, (fan_out, 1), jnp.float32, -bound, bound)
        return w, b

    w1, b1 = linear(ks[0], ks[1], INPUT_SIZE, H1)
    w2, b2 = linear(ks[2], ks[3], H1, H2)
    w3, b3 = linear(ks[4], ks[5], H2, OUT)
    return (w1, b1, w2, b2, w3, b3)


def reference_forward(x, params):
    w1, b1, w2, b2, w3, b3 = params
    h1 = jnp.maximum(x @ w1.T + b1[:, 0], 0.0)
    h2 = jnp.maximum(h1 @ w2.T + b2[:, 0], 0.0)
    return jax.nn.sigmoid(h2 @ w3.T + b3[:, 0])


if __name__ == "__main__":
    key = jax.random.PRNGKey(0)
    k_x, k_x2, k_p = jax.random.split(key, 3)
    params = init_params(k_p)

    # Small batch: pads to a single 128-row tile.
    batch = 8
    x = jax.random.normal(k_x, (batch, INPUT_SIZE), dtype=jnp.float32)
    out = jax.block_until_ready(mlp_forward(x, params))
    ref = reference_forward(x, params)
    assert out.shape == (batch, OUT), out.shape
    assert jnp.allclose(out, ref, atol=5e-5, rtol=5e-5), (out, ref)

    # Multi-step grid check (3 grid steps of 128 rows, last tile padded).
    x2 = jax.random.normal(k_x2, (300, INPUT_SIZE), dtype=jnp.float32)
    out2 = jax.block_until_ready(mlp_forward(x2, params, block_batch=128))
    ref2 = reference_forward(x2, params)
    assert out2.shape == (300, OUT), out2.shape
    assert jnp.allclose(out2, ref2, atol=5e-5, rtol=5e-5)

    print("KERNEL_OK")
</pallas_src>

<mosaic_0001>
module attributes {stable_mosaic.version = 11 : i64} {
  func.func @mlp_kernel(%arg0: i32, %arg1: memref<128x26xf32, #tpu.memory_space<vmem>>, %arg2: memref<64x26xf32, #tpu.memory_space<vmem>>, %arg3: memref<64x1xf32, #tpu.memory_space<vmem>>, %arg4: memref<16x64xf32, #tpu.memory_space<vmem>>, %arg5: memref<16x1xf32, #tpu.memory_space<vmem>>, %arg6: memref<1x16xf32, #tpu.memory_space<vmem>>, %arg7: memref<1x1xf32, #tpu.memory_space<vmem>>, %arg8: memref<1x128xf32, #tpu.memory_space<vmem>>) attributes {dimension_semantics = [#tpu.dimension_semantics<parallel>], iteration_bounds = array<i64: 1>, scalar_prefetch = 0 : i64, scratch_operands = 0 : i64, tpu.core_type = #tpu.core_type<tc>, window_params = [{transform_indices = @transform_0, window_bounds = array<i64: 128, 26>}, {pipeline_mode = #tpu.pipeline_mode<synchronous>, transform_indices = @transform_1, window_bounds = array<i64: 64, 26>}, {pipeline_mode = #tpu.pipeline_mode<synchronous>, transform_indices = @transform_2, window_bounds = array<i64: 64, 1>}, {pipeline_mode = #tpu.pipeline_mode<synchronous>, transform_indices = @transform_3, window_bounds = array<i64: 16, 64>}, {pipeline_mode = #tpu.pipeline_mode<synchronous>, transform_indices = @transform_4, window_bounds = array<i64: 16, 1>}, {pipeline_mode = #tpu.pipeline_mode<synchronous>, transform_indices = @transform_5, window_bounds = array<i64: 1, 16>}, {pipeline_mode = #tpu.pipeline_mode<synchronous>, transform_indices = @transform_6, window_bounds = array<i64: 1, 1>}, {transform_indices = @transform_7, window_bounds = array<i64: 1, 128>}]} {
    %c0 = arith.constant 0 : index
    %c0_0 = arith.constant 0 : index
    %0 = vector.load %arg1[%c0, %c0_0] : memref<128x26xf32, #tpu.memory_space<vmem>>, vector<128x26xf32>
    %c0_1 = arith.constant 0 : index
    %c0_2 = arith.constant 0 : index
    %1 = vector.load %arg2[%c0_1, %c0_2] : memref<64x26xf32, #tpu.memory_space<vmem>>, vector<64x26xf32>
    %cst = arith.constant dense<0.000000e+00> : vector<64x128xf32>
    %2 = tpu.matmul %1, %0, %cst {dimension_numbers = #tpu.dot_dimension_numbers<[1], [1], [0], [0], [0, 0, 1, 0], [], []>} : vector<64x26xf32>, vector<128x26xf32>, vector<64x128xf32> -> vector<64x128xf32>
    %c0_3 = arith.constant 0 : index
    %c0_4 = arith.constant 0 : index
    %3 = vector.load %arg3[%c0_3, %c0_4] : memref<64x1xf32, #tpu.memory_space<vmem>>, vector<64x1xf32>
    %4 = vector.broadcast %3 : vector<64x1xf32> to vector<64x128xf32>
    %5 = arith.addf %2, %4 : vector<64x128xf32>
    %cst_5 = arith.constant 0.000000e+00 : f32
    %6 = vector.broadcast %cst_5 : f32 to vector<64x128xf32>
    %7 = arith.maximumf %5, %6 : vector<64x128xf32>
    %c0_6 = arith.constant 0 : index
    %c0_7 = arith.constant 0 : index
    %8 = vector.load %arg4[%c0_6, %c0_7] : memref<16x64xf32, #tpu.memory_space<vmem>>, vector<16x64xf32>
    %cst_8 = arith.constant dense<0.000000e+00> : vector<16x128xf32>
    %9 = tpu.matmul %8, %7, %cst_8 {dimension_numbers = #tpu.dot_dimension_numbers<[1], [0], [0], [1], [0, 0, 1, 1], [], []>} : vector<16x64xf32>, vector<64x128xf32>, vector<16x128xf32> -> vector<16x128xf32>
    %c0_9 = arith.constant 0 : index
    %c0_10 = arith.constant 0 : index
    %10 = vector.load %arg5[%c0_9, %c0_10] : memref<16x1xf32, #tpu.memory_space<vmem>>, vector<16x1xf32>
    %11 = vector.broadcast %10 : vector<16x1xf32> to vector<16x128xf32>
    %12 = arith.addf %9, %11 : vector<16x128xf32>
    %cst_11 = arith.constant 0.000000e+00 : f32
    %13 = vector.broadcast %cst_11 : f32 to vector<16x128xf32>
    %14 = arith.maximumf %12, %13 : vector<16x128xf32>
    %c0_12 = arith.constant 0 : index
    %c0_13 = arith.constant 0 : index
    %15 = vector.load %arg6[%c0_12, %c0_13] : memref<1x16xf32, #tpu.memory_space<vmem>>, vector<1x16xf32>
    %cst_14 = arith.constant dense<0.000000e+00> : vector<1x128xf32>
    %16 = tpu.matmul %15, %14, %cst_14 {dimension_numbers = #tpu.dot_dimension_numbers<[1], [0], [0], [1], [0, 0, 1, 1], [], []>} : vector<1x16xf32>, vector<16x128xf32>, vector<1x128xf32> -> vector<1x128xf32>
    %c0_15 = arith.constant 0 : index
    %c0_16 = arith.constant 0 : index
    %17 = vector.load %arg7[%c0_15, %c0_16] : memref<1x1xf32, #tpu.memory_space<vmem>>, vector<1x1xf32>
    %18 = vector.broadcast %17 : vector<1x1xf32> to vector<1x128xf32>
    %19 = arith.addf %16, %18 : vector<1x128xf32>
    %20 = math.absf %19 : vector<1x128xf32>
    %cst_17 = arith.constant 0.000000e+00 : f32
    %21 = vector.broadcast %cst_17 : f32 to vector<1x128xf32>
    %22 = arith.subf %21, %20 : vector<1x128xf32>
    %23 = math.exp %22 : vector<1x128xf32>
    %cst_18 = arith.constant 0.000000e+00 : f32
    %24 = vector.broadcast %cst_18 : f32 to vector<1x128xf32>
    %25 = arith.cmpf oge, %19, %24 : vector<1x128xf32>
    %cst_19 = arith.constant 1.000000e+00 : f32
    %26 = vector.broadcast %cst_19 : f32 to vector<1x128xf32>
    %27 = arith.addf %26, %23 : vector<1x128xf32>
    %cst_20 = arith.constant 1.000000e+00 : f32
    %28 = vector.broadcast %cst_20 : f32 to vector<1x128xf32>
    %29 = arith.divf %28, %27 : vector<1x128xf32>
    %cst_21 = arith.constant 1.000000e+00 : f32
    %30 = vector.broadcast %cst_21 : f32 to vector<1x128xf32>
    %31 = arith.addf %30, %23 : vector<1x128xf32>
    %32 = arith.divf %23, %31 : vector<1x128xf32>
    %33 = arith.select %25, %29, %32 : vector<1x128xi1>, vector<1x128xf32>
    %c0_22 = arith.constant 0 : index
    %c0_23 = arith.constant 0 : index
    %34 = vector.load %arg8[%c0_22, %c0_23] : memref<1x128xf32, #tpu.memory_space<vmem>>, vector<1x128xf32>
    tpu.vector_store %arg8[%c0_22, %c0_23], %33 {strides = array<i32>} : memref<1x128xf32, #tpu.memory_space<vmem>>, vector<1x128xf32>,
    return
  }
  func.func @transform_0(%arg0: i32) -> (i32, i32) {
    %c0_i32 = arith.constant 0 : i32
    %c0_i32_0 = arith.constant 0 : i32
    return %arg0, %c0_i32 : i32, i32
  }
  func.func @transform_1(%arg0: i32) -> (i32, i32) {
    %c0_i32 = arith.constant 0 : i32
    %c0_i32_0 = arith.constant 0 : i32
    %c0_i32_1 = arith.constant 0 : i32
    return %c0_i32, %c0_i32_0 : i32, i32
  }
  func.func @transform_2(%arg0: i32) -> (i32, i32) {
    %c0_i32 = arith.constant 0 : i32
    %c0_i32_0 = arith.constant 0 : i32
    %c0_i32_1 = arith.constant 0 : i32
    return %c0_i32, %c0_i32_0 : i32, i32
  }
  func.func @transform_3(%arg0: i32) -> (i32, i32) {
    %c0_i32 = arith.constant 0 : i32
    %c0_i32_0 = arith.constant 0 : i32
    %c0_i32_1 = arith.constant 0 : i32
    return %c0_i32, %c0_i32_0 : i32, i32
  }
  func.func @transform_4(%arg0: i32) -> (i32, i32) {
    %c0_i32 = arith.constant 0 : i32
    %c0_i32_0 = arith.constant 0 : i32
    %c0_i32_1 = arith.constant 0 : i32
    return %c0_i32, %c0_i32_0 : i32, i32
  }
  func.func @transform_5(%arg0: i32) -> (i32, i32) {
    %c0_i32 = arith.constant 0 : i32
    %c0_i32_0 = arith.constant 0 : i32
    %c0_i32_1 = arith.constant 0 : i32
    return %c0_i32, %c0_i32_0 : i32, i32
  }
  func.func @transform_6(%arg0: i32) -> (i32, i32) {
    %c0_i32 = arith.constant 0 : i32
    %c0_i32_0 = arith.constant 0 : i32
    %c0_i32_1 = arith.constant 0 : i32
    return %c0_i32, %c0_i32_0 : i32, i32
  }
  func.func @transform_7(%arg0: i32) -> (i32, i32) {
    %c0_i32 = arith.constant 0 : i32
    %c0_i32_0 = arith.constant 0 : i32
    return %c0_i32, %arg0 : i32, i32
  }
}

</mosaic_0001>

<llo_original>
// kernel: tpu_custom_call.1
$region0: #{tpu_custom_call.1}
  #allocation0 [shape = 'u32[]', space=smem, size = 0x4, offset = 0x4, fixed_abs, tag = 'smem constant byte address 0x4 - core index']
  #allocation1 [shape = 'u32[144,128]{1,0:T(1,128)}', space=vmem, size = 0x12000, scoped, tag = 'internal scratch']
  #allocation2 [shape = 'f32[1,1]{1,0:T(1,128)S(1)}', space=vmem, size = 0x200, scoped, tag = 'scoped memory for tpu_custom_call.1']
  %s0 = inlined_call_operand.hbm [shape: f32[128,26], index: 0, kind: input, shape index: {}]
  %s1 = inlined_call_operand.hbm [shape: f32[64,26], index: 1, kind: input, shape index: {}]
  %s2 = inlined_call_operand.hbm [shape: f32[64,1], index: 2, kind: input, shape index: {}]
  %s3 = inlined_call_operand.hbm [shape: f32[16,64], index: 3, kind: input, shape index: {}]
  %s4 = inlined_call_operand.hbm [shape: f32[16,1], index: 4, kind: input, shape index: {}]
  %s5 = inlined_call_operand.hbm [shape: f32[1,16], index: 5, kind: input, shape index: {}]
  %s6 = inlined_call_operand.<no memory space> [shape: f32[1,1], index: 6, kind: input, shape index: {}]
  %s7 = inlined_call_operand.hbm [shape: f32[1,128], index: 7, kind: output, shape index: {}]
  %s8 = sld [smem:[#allocation0]]
  $region62: #{tpu_custom_call.1} parent=0
    _
  %s10 = ssub.s32 1, %s8
  %s11 = scalar_select 0, %s10, %s8
  %v12 = vstv %s6
  %13 = vst [vmem:[#allocation2] sm:$0x1] %v12
  $region1: #{tpu_custom_call.1} parent=0
    #allocation3 [shape = 'u8[65536]{0}', space=vmem, size = 0x10000, scoped, tag = 'input window, operand 0, single buffered']
    #allocation4 [shape = 's32[1]{0}', space=sflag, size = 0x4, scoped, tag = 'scoped memory for tpu_custom_call.1']
    #allocation5 [shape = 's32[1]{0}', space=sflag, size = 0x4, scoped, tag = 'scoped memory for tpu_custom_call.1']
    #allocation6 [shape = 'u8[32768]{0}', space=vmem, size = 0x8000, scoped, tag = 'input window, operand 1, single buffered']
    #allocation7 [shape = 's32[1]{0}', space=sflag, size = 0x4, scoped, tag = 'scoped memory for tpu_custom_call.1']
    #allocation8 [shape = 'u8[32768]{0}', space=vmem, size = 0x8000, scoped, tag = 'input window, operand 2, single buffered']
    #allocation9 [shape = 'u8[8192]{0}', space=vmem, size = 0x2000, scoped, tag = 'input window, operand 3, single buffered']
    #allocation10 [shape = 's32[1]{0}', space=sflag, size = 0x4, scoped, tag = 'scoped memory for tpu_custom_call.1']
    #allocation11 [shape = 'u8[8192]{0}', space=vmem, size = 0x2000, scoped, tag = 'input window, operand 4, single buffered']
    #allocation12 [shape = 'u8[512]{0}', space=vmem, size = 0x400, scoped, tag = 'input window, operand 5, single buffered']
    #allocation13 [shape = 's32[1]{0}', space=sflag, size = 0x4, scoped, tag = 'scoped memory for tpu_custom_call.1']
    #allocation14 [shape = 'u8[512]{0}', space=vmem, size = 0x400, scoped, tag = 'output window, operand 0, single buffered']
    %14 = vsyncpa [#allocation4], 0
    %15 = vsyncpa [#allocation7], 0
    %16 = vsyncpa [#allocation10], 0
    %17 = vsyncpa [#allocation13], 0
    %18 = vsyncpa [#allocation5], 0
    // Predicated region
    $region2: #{tpu_custom_call.1} parent=1 // pred_check
      _
    $region3: #{tpu_custom_call.1} parent=1 // pred_check_branch
      %20 = sbr.rel (0) target = $region5
    $region4: #{tpu_custom_call.1} parent=1 // pred_region
      %s22 = ssub.s32 2048, 2048
      %23 = vsyncadd [#allocation4], %s22
      %s24 = sshll.u32 [#allocation3], 4
      %s25 = int_to_ptr.vmem [resolvable:$true] %s24
      %30 = dma.hbm_to_vmem [thread:$0]  %s0, 2048, %s25, [#allocation4], 128, 128, 8
    $region5: #{tpu_custom_call.1} parent=1 // pred_fallthru
      _
    // Predicated region
    $region6: #{tpu_custom_call.1} parent=1 // pred_check
      _
    $region7: #{tpu_custom_call.1} parent=1 // pred_check_branch
      %32 = sbr.rel (0) target = $region9
    $region8: #{tpu_custom_call.1} parent=1 // pred_region
      %s34 = ssub.s32 1024, 1024
      %35 = vsyncadd [#allocation7], %s34
      %s36 = sshll.u32 [#allocation6], 4
      %s37 = int_to_ptr.vmem [resolvable:$true] %s36
      %42 = dma.hbm_to_vmem [thread:$0]  %s1, 1024, %s37, [#allocation7], 128, 128, 8
    $region9: #{tpu_custom_call.1} parent=1 // pred_fallthru
      _
    // Predicated region
    $region10: #{tpu_custom_call.1} parent=1 // pred_check
      _
    $region11: #{tpu_custom_call.1} parent=1 // pred_check_branch
      %44 = sbr.rel (0) target = $region13
    $region12: #{tpu_custom_call.1} parent=1 // pred_region
      %s46 = ssub.s32 1024, 1024
      %47 = vsyncadd [#allocation7], %s46
      %s48 = sshll.u32 [#allocation8], 4
      %s49 = int_to_ptr.vmem [resolvable:$true] %s48
      %54 = dma.hbm_to_vmem [thread:$0]  %s2, 1024, %s49, [#allocation7], 128, 128, 8
    $region13: #{tpu_custom_call.1} parent=1 // pred_fallthru
      _
    // Predicated region
    $region14: #{tpu_custom_call.1} parent=1 // pred_check
      _
    $region15: #{tpu_custom_call.1} parent=1 // pred_check_branch
      %56 = sbr.rel (0) target = $region17
    $region16: #{tpu_custom_call.1} parent=1 // pred_region
      %s58 = ssub.s32 256, 256
      %59 = vsyncadd [#allocation10], %s58
      %s60 = sshll.u32 [#allocation9], 4
      %s61 = int_to_ptr.vmem [resolvable:$true] %s60
      %66 = dma.hbm_to_vmem [thread:$0]  %s3, 256, %s61, [#allocation10], 128, 128, 8
    $region17: #{tpu_custom_call.1} parent=1 // pred_fallthru
      _
    // Predicated region
    $region18: #{tpu_custom_call.1} parent=1 // pred_check
      _
    $region19: #{tpu_custom_call.1} parent=1 // pred_check_branch
      %68 = sbr.rel (0) target = $region21
    $region20: #{tpu_custom_call.1} parent=1 // pred_region
      %s70 = ssub.s32 256, 256
      %71 = vsyncadd [#allocation10], %s70
      %s72 = sshll.u32 [#allocation11], 4
      %s73 = int_to_ptr.vmem [resolvable:$true] %s72
      %78 = dma.hbm_to_vmem [thread:$0]  %s4, 256, %s73, [#allocation10], 128, 128, 8
    $region21: #{tpu_custom_call.1} parent=1 // pred_fallthru
      _
    // Predicated region
    $region22: #{tpu_custom_call.1} parent=1 // pred_check
      _
    $region23: #{tpu_custom_call.1} parent=1 // pred_check_branch
      %80 = sbr.rel (0) target = $region25
    $region24: #{tpu_custom_call.1} parent=1 // pred_region
      %s82 = ssub.s32 16, 16
      %83 = vsyncadd [#allocation13], %s82
      %s85 = sshll.u32 [#allocation12], 4
      %s86 = int_to_ptr.vmem [resolvable:$true] %s85
      %88 = dma.hbm_to_vmem [thread:$0]  %s5, 16, %s86, [#allocation13]
    $region25: #{tpu_custom_call.1} parent=1 // pred_fallthru
      _
    // Predicated region
    $region26: #{tpu_custom_call.1} parent=1 // pred_check
      _
    $region27: #{tpu_custom_call.1} parent=1 // pred_check_branch
      %90 = sbr.rel (0) target = $region29
    $region28: #{tpu_custom_call.1} parent=1 // pred_region
      _
    $region29: #{tpu_custom_call.1} parent=1 // pred_fallthru
      _
    // Predicated region
    $region30: #{tpu_custom_call.1} parent=1 // pred_check
      _
    $region31: #{tpu_custom_call.1} parent=1 // pred_check_branch
      %92 = sbr.rel (0) target = $region33
    $region32: #{tpu_custom_call.1} parent=1 // pred_region
      %93 = dma.done [#allocation4], 2048
    $region33: #{tpu_custom_call.1} parent=1 // pred_fallthru
      _
    // Predicated region
    $region34: #{tpu_custom_call.1} parent=1 // pred_check
      _
    $region35: #{tpu_custom_call.1} parent=1 // pred_check_branch
      %95 = sbr.rel (0) target = $region37
    $region36: #{tpu_custom_call.1} parent=1 // pred_region
      %96 = dma.done [#allocation7], 1024
    $region37: #{tpu_custom_call.1} parent=1 // pred_fallthru
      _
    // Predicated region
    $region38: #{tpu_custom_call.1} parent=1 // pred_check
      _
    $region39: #{tpu_custom_call.1} parent=1 // pred_check_branch
      %98 = sbr.rel (0) target = $region41
    $region40: #{tpu_custom_call.1} parent=1 // pred_region
      %99 = dma.done [#allocation7], 1024
    $region41: #{tpu_custom_call.1} parent=1 // pred_fallthru
      _
    // Predicated region
    $region42: #{tpu_custom_call.1} parent=1 // pred_check
      _
    $region43: #{tpu_custom_call.1} parent=1 // pred_check_branch
      %101 = sbr.rel (0) target = $region45
    $region44: #{tpu_custom_call.1} parent=1 // pred_region
      %102 = dma.done [#allocation10], 256
    $region45: #{tpu_custom_call.1} parent=1 // pred_fallthru
      _
    // Predicated region
    $region46: #{tpu_custom_call.1} parent=1 // pred_check
      _
    $region47: #{tpu_custom_call.1} parent=1 // pred_check_branch
      %104 = sbr.rel (0) target = $region49
    $region48: #{tpu_custom_call.1} parent=1 // pred_region
      %105 = dma.done [#allocation10], 256
    $region49: #{tpu_custom_call.1} parent=1 // pred_fallthru
      _
    // Predicated region
    $region50: #{tpu_custom_call.1} parent=1 // pred_check
      _
    $region51: #{tpu_custom_call.1} parent=1 // pred_check_branch
      %107 = sbr.rel (0) target = $region53
    $region52: #{tpu_custom_call.1} parent=1 // pred_region
      %108 = dma.done [#allocation13], 16
    $region53: #{tpu_custom_call.1} parent=1 // pred_fallthru
      _
    %v109 = vld [vmem:[#allocation3] sm:$0xff]
    %v110 = vld [vmem:[#allocation3 + $0x8] sm:$0xff]
    %v111 = vld [vmem:[#allocation3 + $0x10] sm:$0xff]
    %v112 = vld [vmem:[#allocation3 + $0x18] sm:$0xff]
    %v113 = vld [vmem:[#allocation3 + $0x20] sm:$0xff]
    %v114 = vld [vmem:[#allocation3 + $0x28] sm:$0xff]
    %v115 = vld [vmem:[#allocation3 + $0x30] sm:$0xff]
    %v116 = vld [vmem:[#allocation3 + $0x38] sm:$0xff]
    %v117 = vld [vmem:[#allocation3 + $0x40] sm:$0xff]
    %v118 = vld [vmem:[#allocation3 + $0x48] sm:$0xff]
    %v119 = vld [vmem:[#allocation3 + $0x50] sm:$0xff]
    %v120 = vld [vmem:[#allocation3 + $0x58] sm:$0xff]
    %v121 = vld [vmem:[#allocation3 + $0x60] sm:$0xff]
    %v122 = vld [vmem:[#allocation3 + $0x68] sm:$0xff]
    %v123 = vld [vmem:[#allocation3 + $0x70] sm:$0xff]
    %v124 = vld [vmem:[#allocation3 + $0x78] sm:$0xff]
    %v125 = vld [vmem:[#allocation6] sm:$0xff]
    %v126 = vld [vmem:[#allocation6 + $0x8] sm:$0xff]
    %v127 = vld [vmem:[#allocation6 + $0x10] sm:$0xff]
    %v128 = vld [vmem:[#allocation6 + $0x18] sm:$0xff]
    %v129 = vld [vmem:[#allocation6 + $0x20] sm:$0xff]
    %v130 = vld [vmem:[#allocation6 + $0x28] sm:$0xff]
    %v131 = vld [vmem:[#allocation6 + $0x30] sm:$0xff]
    %v132 = vld [vmem:[#allocation6 + $0x38] sm:$0xff]
    %v133 = vld [vmem:[#allocation8] sm:$0xff]
    %v134 = vld [vmem:[#allocation8 + $0x8] sm:$0xff]
    %v135 = vld [vmem:[#allocation8 + $0x10] sm:$0xff]
    %v136 = vld [vmem:[#allocation8 + $0x18] sm:$0xff]
    %v137 = vld [vmem:[#allocation8 + $0x20] sm:$0xff]
    %v138 = vld [vmem:[#allocation8 + $0x28] sm:$0xff]
    %v139 = vld [vmem:[#allocation8 + $0x30] sm:$0xff]
    %v140 = vld [vmem:[#allocation8 + $0x38] sm:$0xff]
    %142 = vset.pattern.permute.xlu0 0
    %143 = vperm.xlu0 %142, %v133
    %v144 = vpop.permute.xlu0 %143
    %147 = vset.pattern.permute.xlu0 0
    %148 = vperm.xlu0 %147, %v134
    %v149 = vpop.permute.xlu0 %148
    %152 = vset.pattern.permute.xlu0 0
    %153 = vperm.xlu0 %152, %v135
    %v154 = vpop.permute.xlu0 %153
    %157 = vset.pattern.permute.xlu0 0
    %158 = vperm.xlu0 %157, %v136
    %v159 = vpop.permute.xlu0 %158
    %162 = vset.pattern.permute.xlu0 0
    %163 = vperm.xlu0 %162, %v137
    %v164 = vpop.permute.xlu0 %163
    %167 = vset.pattern.permute.xlu0 0
    %168 = vperm.xlu0 %167, %v138
    %v169 = vpop.permute.xlu0 %168
    %172 = vset.pattern.permute.xlu0 0
    %173 = vperm.xlu0 %172, %v139
    %v174 = vpop.permute.xlu0 %173
    %177 = vset.pattern.permute.xlu0 0
    %178 = vperm.xlu0 %177, %v140
    %v179 = vpop.permute.xlu0 %178
    %vm181 = vcmask 211968
    %v183 = vsel %vm181, %v125, 0
    %v186 = vsel %vm181, %v126, 0
    %v189 = vsel %vm181, %v127, 0
    %v192 = vsel %vm181, %v128, 0
    %v195 = vsel %vm181, %v129, 0
    %v198 = vsel %vm181, %v130, 0
    %v201 = vsel %vm181, %v131, 0
    %v204 = vsel %vm181, %v132, 0
    %v207 = vsel %vm181, %v109, 0
    %v210 = vsel %vm181, %v110, 0
    %v213 = vsel %vm181, %v111, 0
    %v216 = vsel %vm181, %v112, 0
    %v219 = vsel %vm181, %v113, 0
    %v222 = vsel %vm181, %v114, 0
    %v225 = vsel %vm181, %v115, 0
    %v228 = vsel %vm181, %v116, 0
    %v231 = vsel %vm181, %v117, 0
    %v234 = vsel %vm181, %v118, 0
    %v237 = vsel %vm181, %v119, 0
    %v240 = vsel %vm181, %v120, 0
    %v243 = vsel %vm181, %v121, 0
    %v246 = vsel %vm181, %v122, 0
    %v249 = vsel %vm181, %v123, 0
    %v252 = vsel %vm181, %v124, 0
    %254 = vmatprep.subr.mxu0 0.0
    %255 = vmatpush1.xpose.msra.mxu0 %v207
    %256 = vmatprep.subr.mxu0 0.0
    %257 = vmatpush1.xpose.msra.mxu0 %v210
    %258 = vmatprep.subr.mxu0 0.0
    %259 = vmatpush1.xpose.msra.mxu0 %v213
    %260 = vmatprep.subr.mxu0 0.0
    %261 = vmatpush1.xpose.msra.mxu0 %v216
    %262 = vmatprep.subr.mxu0 0.0
    %263 = vmatpush1.xpose.msra.mxu0 %v219
    %264 = vmatprep.subr.mxu0 0.0
    %265 = vmatpush1.xpose.msra.mxu0 %v222
    %266 = vmatprep.subr.mxu0 0.0
    %267 = vmatpush1.xpose.msra.mxu0 %v225
    %268 = vmatprep.subr.mxu0 0.0
    %269 = vmatpush1.xpose.msra.mxu0 %v228
    %270 = vmatprep.subr.mxu0 0.0
    %271 = vmatpush1.xpose.msra.mxu0 %v231
    %272 = vmatprep.subr.mxu0 0.0
    %273 = vmatpush1.xpose.msra.mxu0 %v234
    %274 = vmatprep.subr.mxu0 0.0
    %275 = vmatpush1.xpose.msra.mxu0 %v237
    %276 = vmatprep.subr.mxu0 0.0
    %277 = vmatpush1.xpose.msra.mxu0 %v240
    %278 = vmatprep.subr.mxu0 0.0
    %279 = vmatpush1.xpose.msra.mxu0 %v243
    %280 = vmatprep.subr.mxu0 0.0
    %281 = vmatpush1.xpose.msra.mxu0 %v246
    %282 = vmatprep.subr.mxu0 0.0
    %283 = vmatpush1.xpose.msra.mxu0 %v249
    %284 = vmatprep.subr.mxu0 0.0
    %285 = vmatpush1.xpose.msra.mxu0 %v252
    %286 = vmatprep.subr.mxu0 0.0
    %287 = vmatpush1.xpose.msra.mxu0 0.0
    %288 = vmatprep.subr.mxu0 0.0
    %289 = vmatpush1.xpose.msra.mxu0 0.0
    %290 = vmatprep.subr.mxu0 0.0
    %291 = vmatpush1.xpose.msra.mxu0 0.0
    %292 = vmatprep.subr.mxu0 0.0
    %293 = vmatpush1.xpose.msra.mxu0 0.0
    %294 = vmatprep.subr.mxu0 0.0
    %295 = vmatpush1.xpose.msra.mxu0 0.0
    %296 = vmatprep.subr.mxu0 0.0
    %297 = vmatpush1.xpose.msra.mxu0 0.0
    %298 = vmatprep.subr.mxu0 0.0
    %299 = vmatpush1.xpose.msra.mxu0 0.0
    %300 = vmatprep.subr.mxu0 0.0
    %301 = vmatpush1.xpose.msra.mxu0 0.0
    %302 = vmatprep.subr.mxu0 0.0
    %303 = vmatpush1.xpose.msra.mxu0 0.0
    %304 = vmatprep.subr.mxu0 0.0
    %305 = vmatpush1.xpose.msra.mxu0 0.0
    %306 = vmatprep.subr.mxu0 0.0
    %307 = vmatpush1.xpose.msra.mxu0 0.0
    %308 = vmatprep.subr.mxu0 0.0
    %309 = vmatpush1.xpose.msra.mxu0 0.0
    %310 = vmatprep.subr.mxu0 0.0
    %311 = vmatpush1.xpose.msra.mxu0 0.0
    %312 = vmatprep.subr.mxu0 0.0
    %313 = vmatpush1.xpose.msra.mxu0 0.0
    %314 = vmatprep.subr.mxu0 0.0
    %315 = vmatpush1.xpose.msra.mxu0 0.0
    %316 = vmatprep.subr.mxu0 0.0
    %317 = vmatpush1.xpose.msra.mxu0 0.0
    %318 = vmatprep.mubr.f32.mxu0 0.0
    %319 = vmatmul.mubr.f32.gmra.mrb[0].mxu0 %v183
    %v320 = vpop.f32.mrb[0].mxu0
    %v321 = vadd.f32 %v144, %v320
    %v322 = vpop.f32.mrb[0].mxu0
    %323 = vmatprep.mubr.f32.mxu0 0.0
    %324 = vmatmul.mubr.f32.gmra.mrb[0].mxu0 %v186
    %v325 = vpop.f32.mrb[0].mxu0
    %v326 = vadd.f32 %v149, %v325
    %v327 = vpop.f32.mrb[0].mxu0
    %328 = vmatprep.mubr.f32.mxu0 0.0
    %329 = vmatmul.mubr.f32.gmra.mrb[0].mxu0 %v189
    %v330 = vpop.f32.mrb[0].mxu0
    %v331 = vadd.f32 %v154, %v330
    %v332 = vpop.f32.mrb[0].mxu0
    %333 = vmatprep.mubr.f32.mxu0 0.0
    %334 = vmatmul.mubr.f32.gmra.mrb[0].mxu0 %v192
    %v335 = vpop.f32.mrb[0].mxu0
    %v336 = vadd.f32 %v159, %v335
    %v337 = vpop.f32.mrb[0].mxu0
    %338 = vmatprep.mubr.f32.mxu0 0.0
    %339 = vmatmul.mubr.f32.gmra.mrb[0].mxu0 %v195
    %v340 = vpop.f32.mrb[0].mxu0
    %v341 = vadd.f32 %v164, %v340
    %v342 = vpop.f32.mrb[0].mxu0
    %343 = vmatprep.mubr.f32.mxu0 0.0
    %344 = vmatmul.mubr.f32.gmra.mrb[0].mxu0 %v198
    %v345 = vpop.f32.mrb[0].mxu0
    %v346 = vadd.f32 %v169, %v345
    %v347 = vpop.f32.mrb[0].mxu0
    %348 = vmatprep.mubr.f32.mxu0 0.0
    %349 = vmatmul.mubr.f32.gmra.mrb[0].mxu0 %v201
    %v350 = vpop.f32.mrb[0].mxu0
    %v351 = vadd.f32 %v174, %v350
    %v352 = vpop.f32.mrb[0].mxu0
    %353 = vmatprep.mubr.f32.mxu0 0.0
    %354 = vmatmul.mubr.f32.gmra.mrb[0].mxu0 %v204
    %v355 = vpop.f32.mrb[0].mxu0
    %v356 = vadd.f32 %v179, %v355
    %v357 = vpop.f32.mrb[0].mxu0
    %358 = vdwg.mxu0
    %v359 = vmax.f32 %v321, 0.0
    %v360 = vmax.f32 %v326, 0.0
    %v361 = vmax.f32 %v331, 0.0
    %v362 = vmax.f32 %v336, 0.0
    %v363 = vmax.f32 %v341, 0.0
    %v364 = vmax.f32 %v346, 0.0
    %v365 = vmax.f32 %v351, 0.0
    %v366 = vmax.f32 %v356, 0.0
    %v367 = vld [vmem:[#allocation9] sm:$0xff]
    %v368 = vld [vmem:[#allocation9 + $0x8] sm:$0xff]
    %v369 = vld [vmem:[#allocation11] sm:$0xff]
    %v370 = vld [vmem:[#allocation11 + $0x8] sm:$0xff]
    %372 = vset.pattern.permute.xlu0 0
    %373 = vperm.xlu0 %372, %v369
    %v374 = vpop.permute.xlu0 %373
    %377 = vset.pattern.permute.xlu0 0
    %378 = vperm.xlu0 %377, %v370
    %v379 = vpop.permute.xlu0 %378
    %vm381 = vcmask 523264
    %v383 = vsel %vm381, %v367, 0
    %v386 = vsel %vm381, %v368, 0
    %388 = vmatprep.subr.mxu0 0.0
    %389 = vmatpush1.msra.mxu0 %v359
    %390 = vmatprep.subr.mxu0 0.0
    %391 = vmatpush1.msra.mxu0 %v360
    %392 = vmatprep.subr.mxu0 0.0
    %393 = vmatpush1.msra.mxu0 %v361
    %394 = vmatprep.subr.mxu0 0.0
    %395 = vmatpush1.msra.mxu0 %v362
    %396 = vmatprep.subr.mxu0 0.0
    %397 = vmatpush1.msra.mxu0 %v363
    %398 = vmatprep.subr.mxu0 0.0
    %399 = vmatpush1.msra.mxu0 %v364
    %400 = vmatprep.subr.mxu0 0.0
    %401 = vmatpush1.msra.mxu0 %v365
    %402 = vmatprep.subr.mxu0 0.0
    %403 = vmatpush1.msra.mxu0 %v366
    %404 = vmatprep.subr.mxu0 0.0
    %405 = vmatpush1.msra.mxu0 0.0
    %406 = vmatprep.subr.mxu0 0.0
    %407 = vmatpush1.msra.mxu0 0.0
    %408 = vmatprep.subr.mxu0 0.0
    %409 = vmatpush1.msra.mxu0 0.0
    %410 = vmatprep.subr.mxu0 0.0
    %411 = vmatpush1.msra.mxu0 0.0
    %412 = vmatprep.subr.mxu0 0.0
    %413 = vmatpush1.msra.mxu0 0.0
    %414 = vmatprep.subr.mxu0 0.0
    %415 = vmatpush1.msra.mxu0 0.0
    %416 = vmatprep.subr.mxu0 0.0
    %417 = vmatpush1.msra.mxu0 0.0
    %418 = vmatprep.subr.mxu0 0.0
    %419 = vmatpush1.msra.mxu0 0.0
    %420 = vmatprep.subr.mxu0 0.0
    %421 = vmatpush1.msra.mxu0 0.0
    %422 = vmatprep.subr.mxu0 0.0
    %423 = vmatpush1.msra.mxu0 0.0
    %424 = vmatprep.subr.mxu0 0.0
    %425 = vmatpush1.msra.mxu0 0.0
    %426 = vmatprep.subr.mxu0 0.0
    %427 = vmatpush1.msra.mxu0 0.0
    %428 = vmatprep.subr.mxu0 0.0
    %429 = vmatpush1.msra.mxu0 0.0
    %430 = vmatprep.subr.mxu0 0.0
    %431 = vmatpush1.msra.mxu0 0.0
    %432 = vmatprep.subr.mxu0 0.0
    %433 = vmatpush1.msra.mxu0 0.0
    %434 = vmatprep.subr.mxu0 0.0
    %435 = vmatpush1.msra.mxu0 0.0
    %436 = vmatprep.subr.mxu0 0.0
    %437 = vmatpush1.msra.mxu0 0.0
    %438 = vmatprep.subr.mxu0 0.0
    %439 = vmatpush1.msra.mxu0 0.0
    %440 = vmatprep.subr.mxu0 0.0
    %441 = vmatpush1.msra.mxu0 0.0
    %442 = vmatprep.subr.mxu0 0.0
    %443 = vmatpush1.msra.mxu0 0.0
    %444 = vmatprep.subr.mxu0 0.0
    %445 = vmatpush1.msra.mxu0 0.0
    %446 = vmatprep.subr.mxu0 0.0
    %447 = vmatpush1.msra.mxu0 0.0
    %448 = vmatprep.subr.mxu0 0.0
    %449 = vmatpush1.msra.mxu0 0.0
    %450 = vmatprep.subr.mxu0 0.0
    %451 = vmatpush1.msra.mxu0 0.0
    %452 = vmatprep.mubr.f32.mxu0 0.0
    %453 = vmatmul.mubr.f32.gmra.mrb[0].mxu0 %v383
    %v454 = vpop.f32.mrb[0].mxu0
    %v455 = vadd.f32 %v374, %v454
    %v456 = vpop.f32.mrb[0].mxu0
    %457 = vmatprep.mubr.f32.mxu0 0.0
    %458 = vmatmul.mubr.f32.gmra.mrb[0].mxu0 %v386
    %v459 = vpop.f32.mrb[0].mxu0
    %v460 = vadd.f32 %v379, %v459
    %v461 = vpop.f32.mrb[0].mxu0
    %462 = vdwg.mxu0
    %v463 = vmax.f32 %v455, 0.0
    %v464 = vmax.f32 %v460, 0.0
    %v465 = vld [vmem:[#allocation12] sm:$0x1]
    %v466 = vld [vmem:[#allocation2] sm:$0x1]
    %468 = vset.pattern.permute.xlu0 0
    %469 = vperm.xlu0 %468, %v466
    %v470 = vpop.permute.xlu0 %469
    %v472 = vlaneseq
    %v473 = vshrl.u32 %v472, 7
    %v474 = vsub.s32 0, %v473
    %v475 = vrot.slane %v470, %v474
    %vm476 = vcmask 130048
    %v478 = vsel %vm476, %v465, 0
    %480 = vmatprep.subr.mxu0 0.0
    %481 = vmatpush1.msra.mxu0 %v463
    %482 = vmatprep.subr.mxu0 0.0
    %483 = vmatpush1.msra.mxu0 %v464
    %484 = vmatprep.subr.mxu0 0.0
    %485 = vmatpush1.msra.mxu0 0.0
    %486 = vmatprep.subr.mxu0 0.0
    %487 = vmatpush1.msra.mxu0 0.0
    %488 = vmatprep.subr.mxu0 0.0
    %489 = vmatpush1.msra.mxu0 0.0
    %490 = vmatprep.subr.mxu0 0.0
    %491 = vmatpush1.msra.mxu0 0.0
    %492 = vmatprep.subr.mxu0 0.0
    %493 = vmatpush1.msra.mxu0 0.0
    %494 = vmatprep.subr.mxu0 0.0
    %495 = vmatpush1.msra.mxu0 0.0
    %496 = vmatprep.subr.mxu0 0.0
    %497 = vmatpush1.msra.mxu0 0.0
    %498 = vmatprep.subr.mxu0 0.0
    %499 = vmatpush1.msra.mxu0 0.0
    %500 = vmatprep.subr.mxu0 0.0
    %501 = vmatpush1.msra.mxu0 0.0
    %502 = vmatprep.subr.mxu0 0.0
    %503 = vmatpush1.msra.mxu0 0.0
    %504 = vmatprep.subr.mxu0 0.0
    %505 = vmatpush1.msra.mxu0 0.0
    %506 = vmatprep.subr.mxu0 0.0
    %507 = vmatpush1.msra.mxu0 0.0
    %508 = vmatprep.subr.mxu0 0.0
    %509 = vmatpush1.msra.mxu0 0.0
    %510 = vmatprep.subr.mxu0 0.0
    %511 = vmatpush1.msra.mxu0 0.0
    %512 = vmatprep.subr.mxu0 0.0
    %513 = vmatpush1.msra.mxu0 0.0
    %514 = vmatprep.subr.mxu0 0.0
    %515 = vmatpush1.msra.mxu0 0.0
    %516 = vmatprep.subr.mxu0 0.0
    %517 = vmatpush1.msra.mxu0 0.0
    %518 = vmatprep.subr.mxu0 0.0
    %519 = vmatpush1.msra.mxu0 0.0
    %520 = vmatprep.subr.mxu0 0.0
    %521 = vmatpush1.msra.mxu0 0.0
    %522 = vmatprep.subr.mxu0 0.0
    %523 = vmatpush1.msra.mxu0 0.0
    %524 = vmatprep.subr.mxu0 0.0
    %525 = vmatpush1.msra.mxu0 0.0
    %526 = vmatprep.subr.mxu0 0.0
    %527 = vmatpush1.msra.mxu0 0.0
    %528 = vmatprep.subr.mxu0 0.0
    %529 = vmatpush1.msra.mxu0 0.0
    %530 = vmatprep.subr.mxu0 0.0
    %531 = vmatpush1.msra.mxu0 0.0
    %532 = vmatprep.subr.mxu0 0.0
    %533 = vmatpush1.msra.mxu0 0.0
    %534 = vmatprep.subr.mxu0 0.0
    %535 = vmatpush1.msra.mxu0 0.0
    %536 = vmatprep.subr.mxu0 0.0
    %537 = vmatpush1.msra.mxu0 0.0
    %538 = vmatprep.subr.mxu0 0.0
    %539 = vmatpush1.msra.mxu0 0.0
    %540 = vmatprep.subr.mxu0 0.0
    %541 = vmatpush1.msra.mxu0 0.0
    %542 = vmatprep.subr.mxu0 0.0
    %543 = vmatpush1.msra.mxu0 0.0
    %544 = vmatprep.mubr.f32.mxu0 0.0
    %545 = vmatmul.mubr.f32.gmra.mrb[0].mxu0 %v478
    %v546 = vpop.f32.mrb[0].mxu0
    %v547 = vadd.f32 %v475, %v546
    %v548 = vpop.f32.mrb[0].mxu0
    %549 = vdwg.mxu0
    %v550 = vand.u32 2147483647, %v547
    %v551 = vsub.f32 0.0, %v550
    %v552 = vmul.f32 %v551, 1.442695
    %v553 = vpow.pop %v552
    %vm554 = vcmp.ge.f32.partialorder %v547, 0.0
    %v555 = vadd.f32 %v553, 1.0
    %v556 = vrcp.pop %v555
    %v557 = vmul.f32 1.0, %v556
    %v558 = vmul.f32 %v553, %v556
    %v559 = vsel %vm554, %v557, %v558
    %560 = vst [vmem:[#allocation14] sm:$0x1] %v559
    // Predicated region
    $region54: #{tpu_custom_call.1} parent=1 // pred_check
      _
    $region55: #{tpu_custom_call.1} parent=1 // pred_check_branch
      %562 = sbr.rel (0) target = $region57
    $region56: #{tpu_custom_call.1} parent=1 // pred_region
      %s564 = ssub.s32 16, 16
      %565 = vsyncadd [#allocation5], %s564
      %s567 = sshll.u32 [#allocation14], 4
      %s568 = int_to_ptr.vmem [resolvable:$true] %s567
      %570 = dma.vmem_to_hbm [thread:$0]  %s568, 16, %s7, [#allocation5]
    $region57: #{tpu_custom_call.1} parent=1 // pred_fallthru
      _
    // Predicated region
    $region58: #{tpu_custom_call.1} parent=1 // pred_check
      _
    $region59: #{tpu_custom_call.1} parent=1 // pred_check_branch
      %572 = sbr.rel (0) target = $region61
    $region60: #{tpu_custom_call.1} parent=1 // pred_region
      %573 = dma.done [#allocation5], 16
    $region61: #{tpu_custom_call.1} parent=1 // pred_fallthru
      _
    %574 = vsyncpa [#allocation4], 1
    %575 = vsyncpa [#allocation7], 1
    %576 = vsyncpa [#allocation10], 1
    %577 = vsyncpa [#allocation13], 1
    %578 = vsyncpa [#allocation5], 1

</llo_original>
